<compile_context>
chip_gen: v6e
topology: v6e:2x2x1
jax: 0.10.0
libtpu: 0.0.40
codegen_flags: <defaults>
</compile_context>

<pallas_src>
import jax
import jax.numpy as jnp
from jax.experimental import pallas as pl
from jax.experimental.pallas import tpu as pltpu


def _copy_kernel(rv_ref, out_ref):
    # Copy the stored return_value tile into the output tile.
    out_ref[...] = rv_ref[...]


def _build_materializer(shape, dtype):
    """Build a jitted callable: return_value -> fresh output array.

    Small arrays: gridless whole-block VMEM copy (no grid, no pipelining
    prologue/epilogue, no double-buffer allocation).
    Large arrays: 1-D grid over the leading axis, ~4 MiB lane-dense blocks
    (full trailing dims -> unmasked vst), axis marked "arbitrary".
    """
    itemsize = int(jnp.dtype(dtype).itemsize)
    nbytes = itemsize
    for d in shape:
        nbytes *= int(d)

    if nbytes <= (4 << 20) or len(shape) < 2:
        call = pl.pallas_call(
            _copy_kernel,
            out_shape=jax.ShapeDtypeStruct(shape, dtype),
            in_specs=[pl.BlockSpec(memory_space=pltpu.MemorySpace.VMEM)],
            out_specs=pl.BlockSpec(memory_space=pltpu.MemorySpace.VMEM),
        )
        return jax.jit(call)

    # Tiled path for big return_values (keeps v7x 32 MiB scoped VMEM happy).
    rows = int(shape[0])
    rest = tuple(int(d) for d in shape[1:])
    row_bytes = max(1, nbytes // rows)
    block_rows = max(8, min(rows, ((4 << 20) // row_bytes) // 8 * 8))
    grid = (pl.cdiv(rows, block_rows),)
    block = (block_rows,) + rest
    rest_zeros = (0,) * len(rest)
    call = pl.pallas_call(
        _copy_kernel,
        out_shape=jax.ShapeDtypeStruct(shape, dtype),
        grid=grid,
        in_specs=[pl.BlockSpec(block, lambda i: (i,) + rest_zeros)],
        out_specs=pl.BlockSpec(block, lambda i: (i,) + rest_zeros),
        compiler_params=pltpu.CompilerParams(
            dimension_semantics=("arbitrary",),
            vmem_limit_bytes=64 << 20,
        ),
    )
    return jax.jit(call)


def _args_equal(a, b):
    if hasattr(a, "shape") and hasattr(b, "shape"):
        return a.shape == b.shape and bool(jnp.all(jnp.asarray(a) == jnp.asarray(b)))
    return a == b


class MockModulePallas:
    """Pallas analogue of MockModule: forward(*args, **kwargs) -> return_value."""

    def __init__(self, return_value: jnp.ndarray) -> None:
        self._return_value = return_value
        self._materialize = _build_materializer(return_value.shape, return_value.dtype)
        self._cached = None
        self._last_call = None  # for assert_called_with parity

    def forward(self, *args, **kwargs) -> jnp.ndarray:
        # Record the call (MagicMock behaviour) and ignore the arguments.
        self._last_call = (args, kwargs)
        if self._cached is None:
            # Materialize the stored return_value once via the Pallas copy
            # kernel; subsequent calls reuse the cached array (mock semantics
            # always return the same value, so no per-call dispatch).
            self._cached = self._materialize(self._return_value)
        return self._cached

    __call__ = forward

    def assert_called_with(self, *args, **kwargs) -> None:
        assert self._last_call is not None, "forward was never called"
        rec_args, rec_kwargs = self._last_call
        assert len(rec_args) == len(args) and all(
            _args_equal(a, b) for a, b in zip(rec_args, args)
        ), "positional args mismatch"
        assert rec_kwargs.keys() == kwargs.keys(), "kwarg keys mismatch"
        assert all(
            _args_equal(rec_kwargs[k], kwargs[k]) for k in kwargs
        ), "kwarg values mismatch"


if __name__ == "__main__":
    key = jax.random.PRNGKey(0)
    k_rv, k_x = jax.random.split(key)

    # Deterministic "return_value" parameter (the only state MockModule holds).
    return_value = jax.random.normal(k_rv, (8, 128), dtype=jnp.float32)

    # Arbitrary call argument (NCHW-style), ignored by the mock forward.
    x = jax.random.normal(k_x, (2, 4, 16, 16), dtype=jnp.float32)

    module = MockModulePallas(return_value)
    out = module(x, flag=True)
    out = jax.block_until_ready(out)

    # Semantics check: output is exactly the stored return_value.
    assert out.shape == return_value.shape
    assert out.dtype == return_value.dtype
    assert bool(jnp.array_equal(out, return_value))

    # Repeated calls hit the cache (no extra kernel dispatch) and stay correct.
    out2 = jax.block_until_ready(module(x, flag=True))
    assert bool(jnp.array_equal(out2, return_value))
    module.assert_called_with(x, flag=True)

    print("KERNEL_OK")
</pallas_src>

<mosaic_0001>
module attributes {stable_mosaic.version = 11 : i64} {
  func.func @_copy_kernel(%arg0: memref<8x128xf32, #tpu.memory_space<vmem>>, %arg1: memref<8x128xf32, #tpu.memory_space<vmem>>) attributes {dimension_semantics = [], scalar_prefetch = 0 : i64, scratch_operands = 0 : i64, tpu.core_type = #tpu.core_type<tc>} {
    %c0 = arith.constant 0 : index
    %c0_0 = arith.constant 0 : index
    %0 = vector.load %arg0[%c0, %c0_0] : memref<8x128xf32, #tpu.memory_space<vmem>>, vector<8x128xf32>
    %c0_1 = arith.constant 0 : index
    %c0_2 = arith.constant 0 : index
    %1 = vector.load %arg1[%c0_1, %c0_2] : memref<8x128xf32, #tpu.memory_space<vmem>>, vector<8x128xf32>
    tpu.vector_store %arg1[%c0_1, %c0_2], %0 {strides = array<i32>} : memref<8x128xf32, #tpu.memory_space<vmem>>, vector<8x128xf32>,
    return
  }
}

</mosaic_0001>

<llo_original>
// kernel: tpu_custom_call.1
$region0: #{tpu_custom_call.1}
  #allocation0 [shape = 'u32[]', space=smem, size = 0x4, offset = 0x4, fixed_abs, tag = 'smem constant byte address 0x4 - core index']
  #allocation1 [shape = 'u32[144,128]{1,0:T(1,128)}', space=vmem, size = 0x12000, scoped, tag = 'internal scratch']
  %s0 = inlined_call_operand.hbm [shape: f32[8,128], index: 0, kind: input, shape index: {}]
  %s1 = inlined_call_operand.hbm [shape: f32[8,128], index: 1, kind: output, shape index: {}]
  %s2 = sld [smem:[#allocation0]]
  $region18: #{tpu_custom_call.1} parent=0
    _
  %s4 = ssub.s32 1, %s2
  %s5 = scalar_select 0, %s4, %s2
  $region1: #{tpu_custom_call.1} parent=0
    #allocation2 [shape = 'u8[4096]{0}', space=vmem, size = 0x1000, scoped, tag = 'input window, operand 0, single buffered']
    #allocation3 [shape = 's32[1]{0}', space=sflag, size = 0x4, scoped, tag = 'scoped memory for tpu_custom_call.1']
    #allocation4 [shape = 's32[1]{0}', space=sflag, size = 0x4, scoped, tag = 'scoped memory for tpu_custom_call.1']
    #allocation5 [shape = 'u8[4096]{0}', space=vmem, size = 0x1000, scoped, tag = 'output window, operand 0, single buffered']
    %6 = vsyncpa [#allocation3], 0
    %7 = vsyncpa [#allocation4], 0
    // Predicated region
    $region2: #{tpu_custom_call.1} parent=1 // pred_check
      _
    $region3: #{tpu_custom_call.1} parent=1 // pred_check_branch
      %9 = sbr.rel (0) target = $region5
    $region4: #{tpu_custom_call.1} parent=1 // pred_region
      %s11 = ssub.s32 128, 128
      %12 = vsyncadd [#allocation3], %s11
      %s14 = sshll.u32 [#allocation2], 4
      %s15 = int_to_ptr.vmem [resolvable:$true] %s14
      %17 = dma.hbm_to_vmem [thread:$0]  %s0, 128, %s15, [#allocation3]
    $region5: #{tpu_custom_call.1} parent=1 // pred_fallthru
      _
    // Predicated region
    $region6: #{tpu_custom_call.1} parent=1 // pred_check
      _
    $region7: #{tpu_custom_call.1} parent=1 // pred_check_branch
      %19 = sbr.rel (0) target = $region9
    $region8: #{tpu_custom_call.1} parent=1 // pred_region
      %20 = dma.done [#allocation3], 128
    $region9: #{tpu_custom_call.1} parent=1 // pred_fallthru
      _
    %v21 = vld [vmem:[#allocation2] sm:$0xff]
    %22 = vst [vmem:[#allocation5] sm:$0xff] %v21
    // Predicated region
    $region10: #{tpu_custom_call.1} parent=1 // pred_check
      _
    $region11: #{tpu_custom_call.1} parent=1 // pred_check_branch
      %24 = sbr.rel (0) target = $region13
    $region12: #{tpu_custom_call.1} parent=1 // pred_region
      %s26 = ssub.s32 128, 128
      %27 = vsyncadd [#allocation4], %s26
      %s29 = sshll.u32 [#allocation5], 4
      %s30 = int_to_ptr.vmem [resolvable:$true] %s29
      %32 = dma.vmem_to_hbm [thread:$0]  %s30, 128, %s1, [#allocation4]
    $region13: #{tpu_custom_call.1} parent=1 // pred_fallthru
      _
    // Predicated region
    $region14: #{tpu_custom_call.1} parent=1 // pred_check
      _
    $region15: #{tpu_custom_call.1} parent=1 // pred_check_branch
      %34 = sbr.rel (0) target = $region17
    $region16: #{tpu_custom_call.1} parent=1 // pred_region
      %35 = dma.done [#allocation4], 128
    $region17: #{tpu_custom_call.1} parent=1 // pred_fallthru
      _
    %36 = vsyncpa [#allocation3], 1
    %37 = vsyncpa [#allocation4], 1

</llo_original>
